<compile_context>
chip_gen: v6e
topology: v6e:2x2x1
jax: 0.10.0
libtpu: 0.0.40
codegen_flags: <defaults>
</compile_context>

<pallas_src>
import functools

import jax
import jax.numpy as jnp
from jax import lax
from jax.experimental import pallas as pl
from jax.experimental.pallas import tpu as pltpu


def _shift_next_rows(p, use_roll):
    """q[i, :] = p[i+1, :] for i < n-1; row n-1 of q is unspecified (wrap)."""
    n = p.shape[0]
    if n == 1:
        return p
    if use_roll:
        # Sublane rotate on the (otherwise idle) XLU; no extra VMEM copy.
        return pltpu.roll(p, shift=n - 1, axis=0)
    return jnp.concatenate([p[1:, :], p[:1, :]], axis=0)


def _fwd_diff_cols(p, use_roll, last_col_mask):
    """Zero-padded horizontal forward diff: d[:, j] = p[:, j+1] - p[:, j],
    last column equals -p[:, -1] (matches conv2d padding=1 semantics)."""
    n = p.shape[1]
    if n == 1:
        return -p
    if use_roll:
        nxt = pltpu.roll(p, shift=n - 1, axis=1)       # lane rotate (XLU)
        return jnp.where(last_col_mask, -p, nxt - p)   # fix wraparound column
    return jnp.concatenate([p[:, 1:] - p[:, :-1], -p[:, n - 1:]], axis=1)


def _tv_kernel(x_ref, out_ref, carry_ref, *, inner_exp, outer_exp, eps,
               double_opponents):
    # x_ref block: (1, 3, TH, W) -- one row-tile of one batch image.
    TH, W = x_ref.shape[2], x_ref.shape[3]
    h = pl.program_id(1)
    num_h = pl.num_programs(1)

    def inner_pow(d):
        if inner_exp == 2.0:
            # Fast path (perf review): (|d|+eps)^2 -> d*d, deviation O(eps).
            return d * d
        a = jnp.abs(d) + eps
        if inner_exp == 1.0:
            return a
        return jnp.power(a, inner_exp)

    def outer_pow(s):
        if outer_exp == 0.5:
            return jnp.sqrt(s)          # single EUP op
        if outer_exp == 1.0:
            return s
        return jnp.power(s, outer_exp)

    def plane_sum(dv3, dh3):
        """Elementwise sum over the TV planes of outer(inner(dv)+inner(dh)).
        Opponent-plane diffs are built by linearity (dv_{r-g}=dv_r-dv_g, ...)."""
        dvs, dhs = list(dv3), list(dh3)
        if double_opponents:
            dvs += [dv3[0] - dv3[1], dv3[0] - dv3[2], dv3[1] - dv3[2]]
            dhs += [dh3[0] - dh3[1], dh3[0] - dh3[2], dh3[1] - dh3[2]]
        acc = None
        for dv, dh in zip(dvs, dhs):
            v = outer_pow(inner_pow(dv) + inner_pow(dh))
            acc = v if acc is None else acc + v
        return acc

    # Load this tile's RGB planes once; cast to f32 in-kernel so HBM traffic
    # stays in the input's native dtype.
    r = x_ref[0, 0, :, :].astype(jnp.float32)
    g = x_ref[0, 1, :, :].astype(jnp.float32)
    b = x_ref[0, 2, :, :].astype(jnp.float32)

    # Use XLU roll only for fully vreg-aligned tiles; otherwise slice/concat.
    use_roll = (TH % 8 == 0) and (W % 128 == 0)
    last_col = (lax.broadcasted_iota(jnp.int32, (TH, W), 1) == W - 1) if use_roll else None

    # Horizontal diffs: valid on every row of the tile.
    dh_r = _fwd_diff_cols(r, use_roll, last_col)
    dh_g = _fwd_diff_cols(g, use_roll, last_col)
    dh_b = _fwd_diff_cols(b, use_roll, last_col)

    # Vertical diffs: valid on rows [0, TH-2]; the tile's last row is handled
    # via the carry (next tile) or the zero-pad rule (last tile of the image).
    dv_r = _shift_next_rows(r, use_roll) - r
    dv_g = _shift_next_rows(g, use_roll) - g
    dv_b = _shift_next_rows(b, use_roll) - b

    @pl.when(h == 0)
    def _init():
        out_ref[...] = jnp.zeros_like(out_ref)

    # Main contribution (all rows except the tile's last one).
    acc = plane_sum((dv_r, dv_g, dv_b), (dh_r, dh_g, dh_b))
    row_idx = lax.broadcasted_iota(jnp.int32, (TH, W), 0)
    masked = jnp.where(row_idx < TH - 1, acc, 0.0)
    out_ref[...] += jnp.sum(masked, keepdims=True).reshape(1, 1, 1)

    # Contribution of the previous tile's last row (vertical diff crosses tiles).
    @pl.when(h > 0)
    def _prev_boundary():
        prev = (carry_ref[0:1, :], carry_ref[1:2, :], carry_ref[2:3, :])
        pdh = (carry_ref[3:4, :], carry_ref[4:5, :], carry_ref[5:6, :])
        dvb = (r[0:1, :] - prev[0], g[0:1, :] - prev[1], b[0:1, :] - prev[2])
        accb = plane_sum(dvb, pdh)
        out_ref[...] += jnp.sum(accb, keepdims=True).reshape(1, 1, 1)

    # Contribution of the image's last row (zero pad below: dv = -x).
    @pl.when(h == num_h - 1)
    def _last_row():
        lr = (r[TH - 1:TH, :], g[TH - 1:TH, :], b[TH - 1:TH, :])
        ldh = (dh_r[TH - 1:TH, :], dh_g[TH - 1:TH, :], dh_b[TH - 1:TH, :])
        accl = plane_sum((-lr[0], -lr[1], -lr[2]), ldh)
        out_ref[...] += jnp.sum(accl, keepdims=True).reshape(1, 1, 1)

    # Carry this tile's last row (values + horizontal diffs) to the next tile.
    carry_ref[0:1, :] = r[TH - 1:TH, :]
    carry_ref[1:2, :] = g[TH - 1:TH, :]
    carry_ref[2:3, :] = b[TH - 1:TH, :]
    carry_ref[3:4, :] = dh_r[TH - 1:TH, :]
    carry_ref[4:5, :] = dh_g[TH - 1:TH, :]
    carry_ref[5:6, :] = dh_b[TH - 1:TH, :]


def _choose_tile_rows(H, W, in_itemsize):
    """Row-tile height that divides H, is a multiple of 8, and keeps the
    double-buffered input block + live f32 temporaries inside scoped VMEM on
    v5e / v6e / v7x."""
    budget = 40 * 1024 * 1024
    per_row = W * (2 * 3 * in_itemsize + 14 * 4)     # dbl-buffered input + ~14 f32 temps
    target = max(8, min(256, budget // max(per_row, 1)))
    target = (target // 8) * 8
    if H <= target:
        return H
    if H % 8 != 0:
        # TODO(synk): support ragged row tiles (in-kernel row masking) for odd H;
        # fall back to a full-image block for now.
        return H
    best = 8
    d = 16
    while d <= target:
        if H % d == 0:
            best = d
        d += 8
    return best


def total_variation(x, *, scale=1.0, inner_exp=2.0, outer_exp=0.5,
                    double_opponents=True, eps=1e-8, tile_rows=None):
    """Pallas implementation of TotalVariation.forward. x: (B, 3, H, W) NCHW."""
    B, C, H, W = x.shape
    if C != 3:
        raise ValueError("TotalVariation expects an RGB (B, 3, H, W) input")
    itemsize = jnp.dtype(x.dtype).itemsize
    TH = int(tile_rows) if tile_rows is not None else _choose_tile_rows(H, W, itemsize)
    if H % TH != 0:
        raise ValueError(f"tile_rows={TH} must divide H={H}")
    num_h = H // TH
    n_channels = 6 if double_opponents else 3

    kernel = functools.partial(
        _tv_kernel,
        inner_exp=float(inner_exp), outer_exp=float(outer_exp),
        eps=float(eps), double_opponents=bool(double_opponents))

    # Explicit scoped-VMEM budget: double-buffered input block + f32 temps.
    block_bytes = 3 * TH * W * itemsize
    est = 2 * block_bytes + 14 * TH * W * 4 + 2 * 8 * W * 4 + (2 << 20)
    vmem_limit = int(min(64 << 20, max(est, 32 << 20)))

    flops_per_px = 45 if double_opponents else 24
    cost = pl.CostEstimate(
        flops=int(flops_per_px * B * H * W),
        transcendentals=int(n_channels * B * H * W),
        bytes_accessed=int(x.size * itemsize + B * 4))

    partials = pl.pallas_call(
        kernel,
        out_shape=jax.ShapeDtypeStruct((B, 1, 1), jnp.float32),
        grid=(B, num_h),
        in_specs=[pl.BlockSpec((1, C, TH, W), lambda bi, hi: (bi, 0, hi, 0))],
        out_specs=pl.BlockSpec((1, 1, 1), lambda bi, hi: (bi, 0, 0)),
        scratch_shapes=[pltpu.VMEM((8, W), jnp.float32)],
        compiler_params=pltpu.CompilerParams(
            dimension_semantics=("parallel", "arbitrary"),
            vmem_limit_bytes=vmem_limit),
        cost_estimate=cost,
    )(x)

    n_elems = float(B * n_channels * H * W)
    return jnp.sum(partials) * (scale / n_elems)


def total_variation_ref(x, *, scale=1.0, inner_exp=2.0, outer_exp=0.5,
                        double_opponents=True, eps=1e-8):
    """Pure-JAX reference mirroring the PyTorch forward."""
    x = x.astype(jnp.float32)
    if double_opponents:
        x = jnp.concatenate(
            [x,
             x[:, 0:1] - x[:, 1:2],
             x[:, 0:1] - x[:, 2:3],
             x[:, 1:2] - x[:, 2:3]],
            axis=1)
    x_down = jnp.pad(x, ((0, 0), (0, 0), (0, 1), (0, 0)))[:, :, 1:, :]
    x_right = jnp.pad(x, ((0, 0), (0, 0), (0, 0), (0, 1)))[:, :, :, 1:]
    dv = x_down - x
    dh = x_right - x
    squares = (jnp.power(jnp.abs(dv) + eps, inner_exp)
               + jnp.power(jnp.abs(dh) + eps, inner_exp))
    vals = jnp.power(squares, outer_exp)
    return jnp.mean(vals) * scale


if __name__ == "__main__":
    key = jax.random.PRNGKey(0)
    k1, k2 = jax.random.split(key)

    # Small generic shape (W not 128-aligned -> slice/concat diff path).
    x1 = jax.random.normal(k1, (2, 3, 16, 16), dtype=jnp.float32)
    out1 = jax.block_until_ready(total_variation(x1))
    ref1 = total_variation_ref(x1)
    assert jnp.allclose(out1, ref1, rtol=1e-4, atol=1e-6), (out1, ref1)

    # vreg-aligned shape with forced row tiling: exercises the XLU roll path,
    # the cross-tile carry, and the per-image accumulation across row tiles.
    x2 = jax.random.normal(k2, (2, 3, 32, 256), dtype=jnp.float32)
    out2 = jax.block_until_ready(total_variation(x2, tile_rows=8))
    ref2 = total_variation_ref(x2)
    assert jnp.allclose(out2, ref2, rtol=1e-4, atol=1e-6), (out2, ref2)

    print("KERNEL_OK")
</pallas_src>

<mosaic_0001>
module attributes {stable_mosaic.version = 11 : i64} {
  func.func @_tv_kernel(%arg0: i32, %arg1: i32, %arg2: memref<1x3x16x16xf32, #tpu.memory_space<vmem>>, %arg3: memref<1x1x1xf32, #tpu.memory_space<vmem>>, %arg4: memref<8x16xf32, #tpu.memory_space<vmem>>) attributes {dimension_semantics = [#tpu.dimension_semantics<parallel>, #tpu.dimension_semantics<arbitrary>], iteration_bounds = array<i64: 2, 1>, scalar_prefetch = 0 : i64, scratch_operands = 1 : i64, tpu.core_type = #tpu.core_type<tc>, window_params = [{transform_indices = @transform_0, window_bounds = array<i64: 1, 3, 16, 16>}, {transform_indices = @transform_1, window_bounds = array<i64: 1, 1, 1>}]} {
    %c0 = arith.constant 0 : index
    %c0_0 = arith.constant 0 : index
    %c0_1 = arith.constant 0 : index
    %c0_2 = arith.constant 0 : index
    %0 = vector.load %arg2[%c0, %c0_0, %c0_1, %c0_2] : memref<1x3x16x16xf32, #tpu.memory_space<vmem>>, vector<1x1x16x16xf32>
    %1 = vector.shape_cast %0 : vector<1x1x16x16xf32> to vector<16x16xf32>
    %c0_3 = arith.constant 0 : index
    %c1 = arith.constant 1 : index
    %c0_4 = arith.constant 0 : index
    %c0_5 = arith.constant 0 : index
    %2 = vector.load %arg2[%c0_3, %c1, %c0_4, %c0_5] : memref<1x3x16x16xf32, #tpu.memory_space<vmem>>, vector<1x1x16x16xf32>
    %3 = vector.shape_cast %2 : vector<1x1x16x16xf32> to vector<16x16xf32>
    %c0_6 = arith.constant 0 : index
    %c2 = arith.constant 2 : index
    %c0_7 = arith.constant 0 : index
    %c0_8 = arith.constant 0 : index
    %4 = vector.load %arg2[%c0_6, %c2, %c0_7, %c0_8] : memref<1x3x16x16xf32, #tpu.memory_space<vmem>>, vector<1x1x16x16xf32>
    %5 = vector.shape_cast %4 : vector<1x1x16x16xf32> to vector<16x16xf32>
    %6 = vector.extract_strided_slice %1 {offsets = [0, 1], sizes = [16, 15], strides = [1, 1]} : vector<16x16xf32> to vector<16x15xf32>
    %7 = vector.extract_strided_slice %1 {offsets = [0, 0], sizes = [16, 15], strides = [1, 1]} : vector<16x16xf32> to vector<16x15xf32>
    %8 = arith.subf %6, %7 : vector<16x15xf32>
    %9 = vector.extract_strided_slice %1 {offsets = [0, 15], sizes = [16, 1], strides = [1, 1]} : vector<16x16xf32> to vector<16x1xf32>
    %cst = arith.constant 0.000000e+00 : f32
    %10 = vector.broadcast %cst : f32 to vector<16x1xf32>
    %11 = arith.subf %10, %9 : vector<16x1xf32>
    %12 = tpu.concatenate %8, %11 in 1 : vector<16x15xf32>, vector<16x1xf32> -> vector<16x16xf32>
    %13 = vector.extract_strided_slice %3 {offsets = [0, 1], sizes = [16, 15], strides = [1, 1]} : vector<16x16xf32> to vector<16x15xf32>
    %14 = vector.extract_strided_slice %3 {offsets = [0, 0], sizes = [16, 15], strides = [1, 1]} : vector<16x16xf32> to vector<16x15xf32>
    %15 = arith.subf %13, %14 : vector<16x15xf32>
    %16 = vector.extract_strided_slice %3 {offsets = [0, 15], sizes = [16, 1], strides = [1, 1]} : vector<16x16xf32> to vector<16x1xf32>
    %cst_9 = arith.constant 0.000000e+00 : f32
    %17 = vector.broadcast %cst_9 : f32 to vector<16x1xf32>
    %18 = arith.subf %17, %16 : vector<16x1xf32>
    %19 = tpu.concatenate %15, %18 in 1 : vector<16x15xf32>, vector<16x1xf32> -> vector<16x16xf32>
    %20 = vector.extract_strided_slice %5 {offsets = [0, 1], sizes = [16, 15], strides = [1, 1]} : vector<16x16xf32> to vector<16x15xf32>
    %21 = vector.extract_strided_slice %5 {offsets = [0, 0], sizes = [16, 15], strides = [1, 1]} : vector<16x16xf32> to vector<16x15xf32>
    %22 = arith.subf %20, %21 : vector<16x15xf32>
    %23 = vector.extract_strided_slice %5 {offsets = [0, 15], sizes = [16, 1], strides = [1, 1]} : vector<16x16xf32> to vector<16x1xf32>
    %cst_10 = arith.constant 0.000000e+00 : f32
    %24 = vector.broadcast %cst_10 : f32 to vector<16x1xf32>
    %25 = arith.subf %24, %23 : vector<16x1xf32>
    %26 = tpu.concatenate %22, %25 in 1 : vector<16x15xf32>, vector<16x1xf32> -> vector<16x16xf32>
    %27 = vector.extract_strided_slice %1 {offsets = [1, 0], sizes = [15, 16], strides = [1, 1]} : vector<16x16xf32> to vector<15x16xf32>
    %28 = vector.extract_strided_slice %1 {offsets = [0, 0], sizes = [1, 16], strides = [1, 1]} : vector<16x16xf32> to vector<1x16xf32>
    %29 = tpu.concatenate %27, %28 in 0 : vector<15x16xf32>, vector<1x16xf32> -> vector<16x16xf32>
    %30 = arith.subf %29, %1 : vector<16x16xf32>
    %31 = vector.extract_strided_slice %3 {offsets = [1, 0], sizes = [15, 16], strides = [1, 1]} : vector<16x16xf32> to vector<15x16xf32>
    %32 = vector.extract_strided_slice %3 {offsets = [0, 0], sizes = [1, 16], strides = [1, 1]} : vector<16x16xf32> to vector<1x16xf32>
    %33 = tpu.concatenate %31, %32 in 0 : vector<15x16xf32>, vector<1x16xf32> -> vector<16x16xf32>
    %34 = arith.subf %33, %3 : vector<16x16xf32>
    %35 = vector.extract_strided_slice %5 {offsets = [1, 0], sizes = [15, 16], strides = [1, 1]} : vector<16x16xf32> to vector<15x16xf32>
    %36 = vector.extract_strided_slice %5 {offsets = [0, 0], sizes = [1, 16], strides = [1, 1]} : vector<16x16xf32> to vector<1x16xf32>
    %37 = tpu.concatenate %35, %36 in 0 : vector<15x16xf32>, vector<1x16xf32> -> vector<16x16xf32>
    %38 = arith.subf %37, %5 : vector<16x16xf32>
    %c0_i32 = arith.constant 0 : i32
    %39 = arith.cmpi eq, %arg1, %c0_i32 : i32
    %40 = arith.extui %39 : i1 to i32
    %c0_i32_11 = arith.constant 0 : i32
    %41 = arith.cmpi ne, %40, %c0_i32_11 : i32
    scf.if %41 {
      %cst_33 = arith.constant 0.000000e+00 : f32
      %109 = vector.broadcast %cst_33 : f32 to vector<1x1x1xf32>
      %c0_34 = arith.constant 0 : index
      %c0_35 = arith.constant 0 : index
      %c0_36 = arith.constant 0 : index
      %110 = vector.load %arg3[%c0_34, %c0_35, %c0_36] : memref<1x1x1xf32, #tpu.memory_space<vmem>>, vector<1x1x1xf32>
      tpu.vector_store %arg3[%c0_34, %c0_35, %c0_36], %109 {strides = array<i32>} : memref<1x1x1xf32, #tpu.memory_space<vmem>>, vector<1x1x1xf32>,
    } else {
    }
    %42 = arith.subf %30, %34 : vector<16x16xf32>
    %43 = arith.subf %30, %38 : vector<16x16xf32>
    %44 = arith.subf %34, %38 : vector<16x16xf32>
    %45 = arith.subf %12, %19 : vector<16x16xf32>
    %46 = arith.subf %12, %26 : vector<16x16xf32>
    %47 = arith.subf %19, %26 : vector<16x16xf32>
    %48 = arith.mulf %30, %30 : vector<16x16xf32>
    %49 = arith.mulf %12, %12 : vector<16x16xf32>
    %50 = arith.addf %48, %49 : vector<16x16xf32>
    %51 = math.sqrt %50 : vector<16x16xf32>
    %52 = arith.mulf %34, %34 : vector<16x16xf32>
    %53 = arith.mulf %19, %19 : vector<16x16xf32>
    %54 = arith.addf %52, %53 : vector<16x16xf32>
    %55 = math.sqrt %54 : vector<16x16xf32>
    %56 = arith.addf %51, %55 : vector<16x16xf32>
    %57 = arith.mulf %38, %38 : vector<16x16xf32>
    %58 = arith.mulf %26, %26 : vector<16x16xf32>
    %59 = arith.addf %57, %58 : vector<16x16xf32>
    %60 = math.sqrt %59 : vector<16x16xf32>
    %61 = arith.addf %56, %60 : vector<16x16xf32>
    %62 = arith.mulf %42, %42 : vector<16x16xf32>
    %63 = arith.mulf %45, %45 : vector<16x16xf32>
    %64 = arith.addf %62, %63 : vector<16x16xf32>
    %65 = math.sqrt %64 : vector<16x16xf32>
    %66 = arith.addf %61, %65 : vector<16x16xf32>
    %67 = arith.mulf %43, %43 : vector<16x16xf32>
    %68 = arith.mulf %46, %46 : vector<16x16xf32>
    %69 = arith.addf %67, %68 : vector<16x16xf32>
    %70 = math.sqrt %69 : vector<16x16xf32>
    %71 = arith.addf %66, %70 : vector<16x16xf32>
    %72 = arith.mulf %44, %44 : vector<16x16xf32>
    %73 = arith.mulf %47, %47 : vector<16x16xf32>
    %74 = arith.addf %72, %73 : vector<16x16xf32>
    %75 = math.sqrt %74 : vector<16x16xf32>
    %76 = arith.addf %71, %75 : vector<16x16xf32>
    %77 = tpu.iota {dimensions = array<i32: 0>} : vector<16x16xi32>
    %c15_i32 = arith.constant 15 : i32
    %78 = vector.broadcast %c15_i32 : i32 to vector<16x16xi32>
    %79 = arith.cmpi slt, %77, %78 : vector<16x16xi32>
    %cst_12 = arith.constant 0.000000e+00 : f32
    %80 = vector.broadcast %cst_12 : f32 to vector<16x16xf32>
    %81 = arith.select %79, %76, %80 : vector<16x16xi1>, vector<16x16xf32>
    %c0_13 = arith.constant 0 : index
    %c0_14 = arith.constant 0 : index
    %c0_15 = arith.constant 0 : index
    %82 = vector.load %arg3[%c0_13, %c0_14, %c0_15] : memref<1x1x1xf32, #tpu.memory_space<vmem>>, vector<1x1x1xf32>
    %83 = vector.shape_cast %81 : vector<16x16xf32> to vector<1x16x16xf32>
    %cst_16 = arith.constant dense<0.000000e+00> : vector<1xf32>
    %84 = vector.multi_reduction <add>, %83, %cst_16 [1, 2] : vector<1x16x16xf32> to vector<1xf32>
    %85 = vector.shape_cast %84 : vector<1xf32> to vector<1x1x1xf32>
    %86 = vector.extract %85[0, 0, 0] : f32 from vector<1x1x1xf32>
    %87 = vector.broadcast %86 : f32 to vector<1x1xf32>
    %88 = vector.shape_cast %87 : vector<1x1xf32> to vector<1x1x1xf32>
    %89 = arith.addf %82, %88 : vector<1x1x1xf32>
    %c0_17 = arith.constant 0 : index
    %c0_18 = arith.constant 0 : index
    %c0_19 = arith.constant 0 : index
    %90 = vector.load %arg3[%c0_17, %c0_18, %c0_19] : memref<1x1x1xf32, #tpu.memory_space<vmem>>, vector<1x1x1xf32>
    tpu.vector_store %arg3[%c0_17, %c0_18, %c0_19], %89 {strides = array<i32>} : memref<1x1x1xf32, #tpu.memory_space<vmem>>, vector<1x1x1xf32>,
    %c0_i32_20 = arith.constant 0 : i32
    %91 = arith.cmpi sgt, %arg1, %c0_i32_20 : i32
    %92 = arith.extui %91 : i1 to i32
    %c0_i32_21 = arith.constant 0 : i32
    %93 = arith.cmpi ne, %92, %c0_i32_21 : i32
    scf.if %93 {
      %c0_33 = arith.constant 0 : index
      %c0_34 = arith.constant 0 : index
      %109 = vector.load %arg4[%c0_33, %c0_34] : memref<8x16xf32, #tpu.memory_space<vmem>>, vector<1x16xf32>
      %c1_35 = arith.constant 1 : index
      %c0_36 = arith.constant 0 : index
      %110 = vector.load %arg4[%c1_35, %c0_36] : memref<8x16xf32, #tpu.memory_space<vmem>>, vector<1x16xf32>
      %c2_37 = arith.constant 2 : index
      %c0_38 = arith.constant 0 : index
      %111 = vector.load %arg4[%c2_37, %c0_38] : memref<8x16xf32, #tpu.memory_space<vmem>>, vector<1x16xf32>
      %c3_39 = arith.constant 3 : index
      %c0_40 = arith.constant 0 : index
      %112 = vector.load %arg4[%c3_39, %c0_40] : memref<8x16xf32, #tpu.memory_space<vmem>>, vector<1x16xf32>
      %c4_41 = arith.constant 4 : index
      %c0_42 = arith.constant 0 : index
      %113 = vector.load %arg4[%c4_41, %c0_42] : memref<8x16xf32, #tpu.memory_space<vmem>>, vector<1x16xf32>
      %c5_43 = arith.constant 5 : index
      %c0_44 = arith.constant 0 : index
      %114 = vector.load %arg4[%c5_43, %c0_44] : memref<8x16xf32, #tpu.memory_space<vmem>>, vector<1x16xf32>
      %115 = vector.extract_strided_slice %1 {offsets = [0, 0], sizes = [1, 16], strides = [1, 1]} : vector<16x16xf32> to vector<1x16xf32>
      %116 = arith.subf %115, %109 : vector<1x16xf32>
      %117 = vector.extract_strided_slice %3 {offsets = [0, 0], sizes = [1, 16], strides = [1, 1]} : vector<16x16xf32> to vector<1x16xf32>
      %118 = arith.subf %117, %110 : vector<1x16xf32>
      %119 = vector.extract_strided_slice %5 {offsets = [0, 0], sizes = [1, 16], strides = [1, 1]} : vector<16x16xf32> to vector<1x16xf32>
      %120 = arith.subf %119, %111 : vector<1x16xf32>
      %121 = arith.subf %116, %118 : vector<1x16xf32>
      %122 = arith.subf %116, %120 : vector<1x16xf32>
      %123 = arith.subf %118, %120 : vector<1x16xf32>
      %124 = arith.subf %112, %113 : vector<1x16xf32>
      %125 = arith.subf %112, %114 : vector<1x16xf32>
      %126 = arith.subf %113, %114 : vector<1x16xf32>
      %127 = arith.mulf %116, %116 : vector<1x16xf32>
      %128 = arith.mulf %112, %112 : vector<1x16xf32>
      %129 = arith.addf %127, %128 : vector<1x16xf32>
      %130 = math.sqrt %129 : vector<1x16xf32>
      %131 = arith.mulf %118, %118 : vector<1x16xf32>
      %132 = arith.mulf %113, %113 : vector<1x16xf32>
      %133 = arith.addf %131, %132 : vector<1x16xf32>
      %134 = math.sqrt %133 : vector<1x16xf32>
      %135 = arith.addf %130, %134 : vector<1x16xf32>
      %136 = arith.mulf %120, %120 : vector<1x16xf32>
      %137 = arith.mulf %114, %114 : vector<1x16xf32>
      %138 = arith.addf %136, %137 : vector<1x16xf32>
      %139 = math.sqrt %138 : vector<1x16xf32>
      %140 = arith.addf %135, %139 : vector<1x16xf32>
      %141 = arith.mulf %121, %121 : vector<1x16xf32>
      %142 = arith.mulf %124, %124 : vector<1x16xf32>
      %143 = arith.addf %141, %142 : vector<1x16xf32>
      %144 = math.sqrt %143 : vector<1x16xf32>
      %145 = arith.addf %140, %144 : vector<1x16xf32>
      %146 = arith.mulf %122, %122 : vector<1x16xf32>
      %147 = arith.mulf %125, %125 : vector<1x16xf32>
      %148 = arith.addf %146, %147 : vector<1x16xf32>
      %149 = math.sqrt %148 : vector<1x16xf32>
      %150 = arith.addf %145, %149 : vector<1x16xf32>
      %151 = arith.mulf %123, %123 : vector<1x16xf32>
      %152 = arith.mulf %126, %126 : vector<1x16xf32>
      %153 = arith.addf %151, %152 : vector<1x16xf32>
      %154 = math.sqrt %153 : vector<1x16xf32>
      %155 = arith.addf %150, %154 : vector<1x16xf32>
      %c0_45 = arith.constant 0 : index
      %c0_46 = arith.constant 0 : index
      %c0_47 = arith.constant 0 : index
      %156 = vector.load %arg3[%c0_45, %c0_46, %c0_47] : memref<1x1x1xf32, #tpu.memory_space<vmem>>, vector<1x1x1xf32>
      %157 = vector.shape_cast %155 : vector<1x16xf32> to vector<1x1x16xf32>
      %cst_48 = arith.constant dense<0.000000e+00> : vector<1xf32>
      %158 = vector.multi_reduction <add>, %157, %cst_48 [1, 2] : vector<1x1x16xf32> to vector<1xf32>
      %159 = vector.shape_cast %158 : vector<1xf32> to vector<1x1x1xf32>
      %160 = vector.extract %159[0, 0, 0] : f32 from vector<1x1x1xf32>
      %161 = vector.broadcast %160 : f32 to vector<1x1xf32>
      %162 = vector.shape_cast %161 : vector<1x1xf32> to vector<1x1x1xf32>
      %163 = arith.addf %156, %162 : vector<1x1x1xf32>
      %c0_49 = arith.constant 0 : index
      %c0_50 = arith.constant 0 : index
      %c0_51 = arith.constant 0 : index
      %164 = vector.load %arg3[%c0_49, %c0_50, %c0_51] : memref<1x1x1xf32, #tpu.memory_space<vmem>>, vector<1x1x1xf32>
      tpu.vector_store %arg3[%c0_49, %c0_50, %c0_51], %163 {strides = array<i32>} : memref<1x1x1xf32, #tpu.memory_space<vmem>>, vector<1x1x1xf32>,
    } else {
    }
    %c0_i32_22 = arith.constant 0 : i32
    %94 = arith.cmpi eq, %arg1, %c0_i32_22 : i32
    %95 = arith.extui %94 : i1 to i32
    %c0_i32_23 = arith.constant 0 : i32
    %96 = arith.cmpi ne, %95, %c0_i32_23 : i32
    scf.if %96 {
      %109 = vector.extract_strided_slice %1 {offsets = [15, 0], sizes = [1, 16], strides = [1, 1]} : vector<16x16xf32> to vector<1x16xf32>
      %110 = vector.extract_strided_slice %3 {offsets = [15, 0], sizes = [1, 16], strides = [1, 1]} : vector<16x16xf32> to vector<1x16xf32>
      %111 = vector.extract_strided_slice %5 {offsets = [15, 0], sizes = [1, 16], strides = [1, 1]} : vector<16x16xf32> to vector<1x16xf32>
      %112 = vector.extract_strided_slice %12 {offsets = [15, 0], sizes = [1, 16], strides = [1, 1]} : vector<16x16xf32> to vector<1x16xf32>
      %113 = vector.extract_strided_slice %19 {offsets = [15, 0], sizes = [1, 16], strides = [1, 1]} : vector<16x16xf32> to vector<1x16xf32>
      %114 = vector.extract_strided_slice %26 {offsets = [15, 0], sizes = [1, 16], strides = [1, 1]} : vector<16x16xf32> to vector<1x16xf32>
      %cst_33 = arith.constant 0.000000e+00 : f32
      %115 = vector.broadcast %cst_33 : f32 to vector<1x16xf32>
      %116 = arith.subf %115, %109 : vector<1x16xf32>
      %cst_34 = arith.constant 0.000000e+00 : f32
      %117 = vector.broadcast %cst_34 : f32 to vector<1x16xf32>
      %118 = arith.subf %117, %110 : vector<1x16xf32>
      %cst_35 = arith.constant 0.000000e+00 : f32
      %119 = vector.broadcast %cst_35 : f32 to vector<1x16xf32>
      %120 = arith.subf %119, %111 : vector<1x16xf32>
      %121 = arith.subf %116, %118 : vector<1x16xf32>
      %122 = arith.subf %116, %120 : vector<1x16xf32>
      %123 = arith.subf %118, %120 : vector<1x16xf32>
      %124 = arith.subf %112, %113 : vector<1x16xf32>
      %125 = arith.subf %112, %114 : vector<1x16xf32>
      %126 = arith.subf %113, %114 : vector<1x16xf32>
      %127 = arith.mulf %116, %116 : vector<1x16xf32>
      %128 = arith.mulf %112, %112 : vector<1x16xf32>
      %129 = arith.addf %127, %128 : vector<1x16xf32>
      %130 = math.sqrt %129 : vector<1x16xf32>
      %131 = arith.mulf %118, %118 : vector<1x16xf32>
      %132 = arith.mulf %113, %113 : vector<1x16xf32>
      %133 = arith.addf %131, %132 : vector<1x16xf32>
      %134 = math.sqrt %133 : vector<1x16xf32>
      %135 = arith.addf %130, %134 : vector<1x16xf32>
      %136 = arith.mulf %120, %120 : vector<1x16xf32>
      %137 = arith.mulf %114, %114 : vector<1x16xf32>
      %138 = arith.addf %136, %137 : vector<1x16xf32>
      %139 = math.sqrt %138 : vector<1x16xf32>
      %140 = arith.addf %135, %139 : vector<1x16xf32>
      %141 = arith.mulf %121, %121 : vector<1x16xf32>
      %142 = arith.mulf %124, %124 : vector<1x16xf32>
      %143 = arith.addf %141, %142 : vector<1x16xf32>
      %144 = math.sqrt %143 : vector<1x16xf32>
      %145 = arith.addf %140, %144 : vector<1x16xf32>
      %146 = arith.mulf %122, %122 : vector<1x16xf32>
      %147 = arith.mulf %125, %125 : vector<1x16xf32>
      %148 = arith.addf %146, %147 : vector<1x16xf32>
      %149 = math.sqrt %148 : vector<1x16xf32>
      %150 = arith.addf %145, %149 : vector<1x16xf32>
      %151 = arith.mulf %123, %123 : vector<1x16xf32>
      %152 = arith.mulf %126, %126 : vector<1x16xf32>
      %153 = arith.addf %151, %152 : vector<1x16xf32>
      %154 = math.sqrt %153 : vector<1x16xf32>
      %155 = arith.addf %150, %154 : vector<1x16xf32>
      %c0_36 = arith.constant 0 : index
      %c0_37 = arith.constant 0 : index
      %c0_38 = arith.constant 0 : index
      %156 = vector.load %arg3[%c0_36, %c0_37, %c0_38] : memref<1x1x1xf32, #tpu.memory_space<vmem>>, vector<1x1x1xf32>
      %157 = vector.shape_cast %155 : vector<1x16xf32> to vector<1x1x16xf32>
      %cst_39 = arith.constant dense<0.000000e+00> : vector<1xf32>
      %158 = vector.multi_reduction <add>, %157, %cst_39 [1, 2] : vector<1x1x16xf32> to vector<1xf32>
      %159 = vector.shape_cast %158 : vector<1xf32> to vector<1x1x1xf32>
      %160 = vector.extract %159[0, 0, 0] : f32 from vector<1x1x1xf32>
      %161 = vector.broadcast %160 : f32 to vector<1x1xf32>
      %162 = vector.shape_cast %161 : vector<1x1xf32> to vector<1x1x1xf32>
      %163 = arith.addf %156, %162 : vector<1x1x1xf32>
      %c0_40 = arith.constant 0 : index
      %c0_41 = arith.constant 0 : index
      %c0_42 = arith.constant 0 : index
      %164 = vector.load %arg3[%c0_40, %c0_41, %c0_42] : memref<1x1x1xf32, #tpu.memory_space<vmem>>, vector<1x1x1xf32>
      tpu.vector_store %arg3[%c0_40, %c0_41, %c0_42], %163 {strides = array<i32>} : memref<1x1x1xf32, #tpu.memory_space<vmem>>, vector<1x1x1xf32>,
    } else {
    }
    %97 = vector.extract_strided_slice %1 {offsets = [15, 0], sizes = [1, 16], strides = [1, 1]} : vector<16x16xf32> to vector<1x16xf32>
    %c0_24 = arith.constant 0 : index
    %c0_25 = arith.constant 0 : index
    %98 = vector.load %arg4[%c0_24, %c0_25] : memref<8x16xf32, #tpu.memory_space<vmem>>, vector<1x16xf32>
    tpu.vector_store %arg4[%c0_24, %c0_25], %97 {strides = array<i32>} : memref<8x16xf32, #tpu.memory_space<vmem>>, vector<1x16xf32>,
    %99 = vector.extract_strided_slice %3 {offsets = [15, 0], sizes = [1, 16], strides = [1, 1]} : vector<16x16xf32> to vector<1x16xf32>
    %c1_26 = arith.constant 1 : index
    %c0_27 = arith.constant 0 : index
    %100 = vector.load %arg4[%c1_26, %c0_27] : memref<8x16xf32, #tpu.memory_space<vmem>>, vector<1x16xf32>
    tpu.vector_store %arg4[%c1_26, %c0_27], %99 {strides = array<i32>} : memref<8x16xf32, #tpu.memory_space<vmem>>, vector<1x16xf32>,
    %101 = vector.extract_strided_slice %5 {offsets = [15, 0], sizes = [1, 16], strides = [1, 1]} : vector<16x16xf32> to vector<1x16xf32>
    %c2_28 = arith.constant 2 : index
    %c0_29 = arith.constant 0 : index
    %102 = vector.load %arg4[%c2_28, %c0_29] : memref<8x16xf32, #tpu.memory_space<vmem>>, vector<1x16xf32>
    tpu.vector_store %arg4[%c2_28, %c0_29], %101 {strides = array<i32>} : memref<8x16xf32, #tpu.memory_space<vmem>>, vector<1x16xf32>,
    %103 = vector.extract_strided_slice %12 {offsets = [15, 0], sizes = [1, 16], strides = [1, 1]} : vector<16x16xf32> to vector<1x16xf32>
    %c3 = arith.constant 3 : index
    %c0_30 = arith.constant 0 : index
    %104 = vector.load %arg4[%c3, %c0_30] : memref<8x16xf32, #tpu.memory_space<vmem>>, vector<1x16xf32>
    tpu.vector_store %arg4[%c3, %c0_30], %103 {strides = array<i32>} : memref<8x16xf32, #tpu.memory_space<vmem>>, vector<1x16xf32>,
    %105 = vector.extract_strided_slice %19 {offsets = [15, 0], sizes = [1, 16], strides = [1, 1]} : vector<16x16xf32> to vector<1x16xf32>
    %c4 = arith.constant 4 : index
    %c0_31 = arith.constant 0 : index
    %106 = vector.load %arg4[%c4, %c0_31] : memref<8x16xf32, #tpu.memory_space<vmem>>, vector<1x16xf32>
    tpu.vector_store %arg4[%c4, %c0_31], %105 {strides = array<i32>} : memref<8x16xf32, #tpu.memory_space<vmem>>, vector<1x16xf32>,
    %107 = vector.extract_strided_slice %26 {offsets = [15, 0], sizes = [1, 16], strides = [1, 1]} : vector<16x16xf32> to vector<1x16xf32>
    %c5 = arith.constant 5 : index
    %c0_32 = arith.constant 0 : index
    %108 = vector.load %arg4[%c5, %c0_32] : memref<8x16xf32, #tpu.memory_space<vmem>>, vector<1x16xf32>
    tpu.vector_store %arg4[%c5, %c0_32], %107 {strides = array<i32>} : memref<8x16xf32, #tpu.memory_space<vmem>>, vector<1x16xf32>,
    return
  }
  func.func @transform_0(%arg0: i32, %arg1: i32) -> (i32, i32, i32, i32) {
    %c0_i32 = arith.constant 0 : i32
    %c0_i32_0 = arith.constant 0 : i32
    %c0_i32_1 = arith.constant 0 : i32
    return %arg0, %c0_i32, %arg1, %c0_i32_0 : i32, i32, i32, i32
  }
  func.func @transform_1(%arg0: i32, %arg1: i32) -> (i32, i32, i32) {
    %c0_i32 = arith.constant 0 : i32
    %c0_i32_0 = arith.constant 0 : i32
    %c0_i32_1 = arith.constant 0 : i32
    return %arg0, %c0_i32, %c0_i32_0 : i32, i32, i32
  }
}

</mosaic_0001>

<llo_original>
// kernel: tpu_custom_call.1
$region0: #{tpu_custom_call.1}
  #allocation0 [shape = 'u32[]', space=smem, size = 0x4, offset = 0x4, fixed_abs, tag = 'smem constant byte address 0x4 - core index']
  #allocation1 [shape = 'u32[144,128]{1,0:T(1,128)}', space=vmem, size = 0x12000, scoped, tag = 'internal scratch']
  #allocation2 [shape = 'f32[8,16]{1,0:T(8,128)}', space=vmem, size = 0x1000, scoped, tag = 'scratch operand']
  %s0 = inlined_call_operand.hbm [shape: f32[2,3,16,16], index: 0, kind: input, shape index: {}]
  %s1 = inlined_call_operand.vmem [shape: f32[2,1,1], index: 1, kind: output, shape index: {}]
  %s2 = sld [smem:[#allocation0]]
  $region53: #{tpu_custom_call.1} parent=0
    _
  %s4 = ssub.s32 1, %s2
  %s5 = scalar_select 0, %s4, %s2
  $region1: #{tpu_custom_call.1} parent=0
    #allocation3 [shape = 'u8[49152]{0}', space=vmem, size = 0xc000, scoped, tag = 'input window, operand 0']
    #allocation4 [shape = 's32[2]{0}', space=sflag, size = 0x8, scoped, tag = 'scoped memory for tpu_custom_call.1']
    %6 = vsyncpa [#allocation4], 0
    %s7 = scalar_lea.sflag [#allocation4], 1
    %8 = vsyncpa %s7, 0
    loop: start=0, step=1, limit=4
    $region2: #{tpu_custom_call.1} parent=1 // loop_pre_header
      _
    $region3: #{tpu_custom_call.1} parent=1 // loop_header
      %s10 = sphi 0, %s14
      %p11 = scmp.ge.s32.totalorder %s10, 4
      %s17 = sphi 0, %s29
      %s18 = sphi 0, %s25
      %s19 = sphi 0, %s17
      %s20 = sphi 0, %s18
      %s21 = sphi 0, %s19
      %s22 = sphi 0, %s20
      %s34 = sphi 0, %s36
      %s37 = sphi 0, %s34
      %s38 = sphi 0, %s37
      %s54 = sphi 0, %s38
      %s60 = sphi 0, %s62
      %s63 = sphi 0, %s60
      %s64 = sphi 0, %s63
      %s80 = sphi 0, %s64
    $region4: #{tpu_custom_call.1} parent=1 // loop_header_branch
      %13 = sbr.rel (%p11) target = $region8
    $region5: #{tpu_custom_call.1} parent=1 // loop_body
      %s15 = ssub.s32 %s10, 1
      %s16 = ssub.s32 %s10, 2
      %s23 = sadd.s32 1, %s18
      %p24 = scmp.ge.s32.totalorder %s23, 1
      %s25 = scalar_select %p24, 0, %s23
      %s26 = sadd.s32 1, %s17
      %s27 = scalar_select %p24, %s26, %s17
      %p28 = scmp.ge.s32.totalorder %s27, 2
      %s29 = scalar_select %p28, 0, %s27
      %s30 = ssub.s32 %s17, %s29
      %s31 = ssub.s32 %s18, %s25
      %s32 = sor.u32 %s30, %s31
      %p33 = scmp.eq.s32.totalorder %s32, 0
      %s35 = sadd.s32 %s34, 1
      %s36 = scalar_select %p33, %s34, %s35
      %p39 = pneg %p33
      %p40 = scmp.eq.s32.totalorder %s10, 1
      %p41 = por %p39, %p40
      %p42 = scmp.ne.s32.totalorder %s34, %s37
      %p43 = scmp.eq.s32.totalorder %s10, 0
      %p44 = por %p42, %p43
      %p45 = scmp.ne.s32.totalorder %s34, %s37
      %p46 = scmp.eq.s32.totalorder %s15, 1
      %p47 = por %p45, %p46
      %p48 = scmp.ne.s32.totalorder %s37, %s38
      %p49 = scmp.eq.s32.totalorder %s15, 0
      %p50 = por %p48, %p49
      %p51 = scmp.ne.s32.totalorder %s37, %s38
      %p52 = scmp.eq.s32.totalorder %s16, 1
      %p53 = por %p51, %p52
      %p55 = scmp.ne.s32.totalorder %s38, %s54
      %p56 = scmp.eq.s32.totalorder %s16, 0
      %p57 = por %p55, %p56
      %s58 = ssub.s32 %s17, %s29
      %p59 = scmp.eq.s32.totalorder %s58, 0
      %s61 = sadd.s32 %s60, 1
      %s62 = scalar_select %p59, %s60, %s61
      %p65 = pneg %p59
      %p66 = scmp.eq.s32.totalorder %s10, 1
      %p67 = por %p65, %p66
      %p68 = scmp.ne.s32.totalorder %s60, %s63
      %p69 = scmp.eq.s32.totalorder %s10, 0
      %p70 = por %p68, %p69
      %p71 = scmp.ne.s32.totalorder %s60, %s63
      %p72 = scmp.eq.s32.totalorder %s15, 1
      %p73 = por %p71, %p72
      %p74 = scmp.ne.s32.totalorder %s63, %s64
      %p75 = scmp.eq.s32.totalorder %s15, 0
      %p76 = por %p74, %p75
      %p77 = scmp.ne.s32.totalorder %s63, %s64
      %p78 = scmp.eq.s32.totalorder %s16, 1
      %p79 = por %p77, %p78
      %p81 = scmp.ne.s32.totalorder %s64, %s80
      %p82 = scmp.eq.s32.totalorder %s16, 0
      %p83 = por %p81, %p82
      %p84 = scmp.le.s32.totalorder 1, %s10
      %p85 = scmp.lt.s32.totalorder %s10, 3
      %p86 = pnand %p84, %p85
      %p87 = pneg %p86
      // Predicated region
      $region9: #{tpu_custom_call.1} parent=5 // pred_check
        _
      $region10: #{tpu_custom_call.1} parent=5 // pred_check_branch
        %89 = sbr.rel (%p86) target = $region12
      $region11: #{tpu_custom_call.1} parent=5 // pred_region
        %s90 = ssub.s32 %s10, 1
      $region12: #{tpu_custom_call.1} parent=5 // pred_fallthru
        _
      %p91 = scmp.lt.s32.totalorder %s10, 2
      // Predicated region
      $region13: #{tpu_custom_call.1} parent=5 // pred_check
        %p92 = pneg %p91
      $region14: #{tpu_custom_call.1} parent=5 // pred_check_branch
        %94 = sbr.rel (%p92) target = $region16
      $region15: #{tpu_custom_call.1} parent=5 // pred_region
        // Predicated region
        $region17: #{tpu_custom_call.1} parent=15 // pred_check
          %p95 = pneg %p44
        $region18: #{tpu_custom_call.1} parent=15 // pred_check_branch
          %97 = sbr.rel (%p95) target = $region20
        $region19: #{tpu_custom_call.1} parent=15 // pred_region
          %s98 = sand.u32 %s34, 1
          %s99 = scalar_lea.sflag [#allocation4], %s98
          %s100 = sand.u32 %s34, 1
          %s101 = smul.addr %s100, 48
          %s102 = scalar_lea.vmem [#allocation3], %s101
          %s103 = smul.u32 2, %s18
          %s105 = ssub.s32 768, 768
          %106 = vsyncadd %s99, %s105
          %s107 = smul.addr %s17, 6
          %s108 = sadd.s32 %s103, %s107
          %s109 = smul.addr %s108, 128
          %s110 = scalar_lea.hbm %s0, %s109
          %s111 = sshll.u32 %s102, 4
          %s112 = int_to_ptr.vmem [resolvable:$true] %s111
          %117 = dma.hbm_to_vmem [thread:$0]  %s110, 768, %s112, %s99, 128, 128, 8
        $region20: #{tpu_custom_call.1} parent=15 // pred_fallthru
          _
      $region16: #{tpu_custom_call.1} parent=5 // pred_fallthru
        _
      %p118 = scmp.le.s32.totalorder 1, %s10
      %p119 = scmp.lt.s32.totalorder %s10, 3
      %p120 = pnand %p118, %p119
      %p121 = pneg %p120
      // Predicated region
      $region21: #{tpu_custom_call.1} parent=5 // pred_check
        _
      $region22: #{tpu_custom_call.1} parent=5 // pred_check_branch
        %123 = sbr.rel (%p120) target = $region24
      $region23: #{tpu_custom_call.1} parent=5 // pred_region
        %s124 = ssub.s32 %s10, 1
        %s125 = sand.u32 %s37, 1
        %s126 = scalar_lea.sflag [#allocation4], %s125
        %s127 = sand.u32 %s37, 1
        %s128 = smul.addr %s127, 48
        %s129 = scalar_lea.vmem [#allocation3], %s128
        // Predicated region
        $region25: #{tpu_custom_call.1} parent=23 // pred_check
          %p130 = pneg %p50
        $region26: #{tpu_custom_call.1} parent=23 // pred_check_branch
          %132 = sbr.rel (%p130) target = $region28
        $region27: #{tpu_custom_call.1} parent=23 // pred_region
          %133 = dma.done %s126, 768
        $region28: #{tpu_custom_call.1} parent=23 // pred_fallthru
          _
        %s134 = sand.u32 %s37, 1
        %s135 = scalar_lea.sflag [#allocation4], %s134
        %s136 = sand.u32 %s37, 1
        %s137 = smul.addr %s136, 48
        %s138 = scalar_lea.vmem [#allocation3], %s137
        %p139 = pneg %p50
        %p140 = pneg %p47
        %p141 = pneg %p76
        %p142 = pneg %p73
        %p143 = scmp.lt.s32.totalorder %s19, 1
        %s144 = scalar_select %p143, %s19, 1
        %s145 = scalar_lea.vmem %s1, %s144
        %s146 = smul.u32 2, %s20
        %p147 = scmp.lt.s32.totalorder %s19, 1
        %s148 = scalar_select %p147, %s19, 1
        %s149 = scalar_lea.vmem %s1, %s148
        %v150 = vld [vmem:[%s129] sm:$0xff]
        %v151 = vld [vmem:[%s129 + $0x8] sm:$0xff]
        %s152 = scalar_lea.vmem %s129, 16 [#allocation3]
        %v153 = vld [vmem:[%s152] sm:$0xff]
        %v154 = vld [vmem:[%s152 + $0x8] sm:$0xff]
        %s155 = scalar_lea.vmem %s129, 32 [#allocation3]
        %v156 = vld [vmem:[%s155] sm:$0xff]
        %v157 = vld [vmem:[%s155 + $0x8] sm:$0xff]
        %160 = vrot.lane.b32.xlu0 %v150, 1
        %v161 = vpop.permute.xlu0 %160
        %162 = vrot.lane.b32.xlu0 %v151, 1
        %v163 = vpop.permute.xlu0 %162
        %v166 = vsub.f32 %v150, %v161
        %v167 = vsub.f32 %v151, %v163
        %v168 = vsub.f32 0.0, %v150
        %v169 = vsub.f32 0.0, %v151
        %172 = vrot.lane.b32.xlu0 %v166, 127
        %v173 = vpop.permute.xlu0 %172
        %174 = vrot.lane.b32.xlu0 %v167, 127
        %v175 = vpop.permute.xlu0 %174
        %vm178 = vcmask 121856
        %v179 = vsel %vm178, %v173, %v168
        %v180 = vsel %vm178, %v175, %v169
        %183 = vrot.lane.b32.xlu0 %v153, 1
        %v184 = vpop.permute.xlu0 %183
        %185 = vrot.lane.b32.xlu0 %v154, 1
        %v186 = vpop.permute.xlu0 %185
        %v189 = vsub.f32 %v153, %v184
        %v190 = vsub.f32 %v154, %v186
        %v191 = vsub.f32 0.0, %v153
        %v192 = vsub.f32 0.0, %v154
        %195 = vrot.lane.b32.xlu0 %v189, 127
        %v196 = vpop.permute.xlu0 %195
        %197 = vrot.lane.b32.xlu0 %v190, 127
        %v198 = vpop.permute.xlu0 %197
        %v201 = vsel %vm178, %v196, %v191
        %v202 = vsel %vm178, %v198, %v192
        %205 = vrot.lane.b32.xlu0 %v156, 1
        %v206 = vpop.permute.xlu0 %205
        %207 = vrot.lane.b32.xlu0 %v157, 1
        %v208 = vpop.permute.xlu0 %207
        %v211 = vsub.f32 %v156, %v206
        %v212 = vsub.f32 %v157, %v208
        %v213 = vsub.f32 0.0, %v156
        %v214 = vsub.f32 0.0, %v157
        %217 = vrot.lane.b32.xlu0 %v211, 127
        %v218 = vpop.permute.xlu0 %217
        %219 = vrot.lane.b32.xlu0 %v212, 127
        %v220 = vpop.permute.xlu0 %219
        %v223 = vsel %vm178, %v218, %v213
        %v224 = vsel %vm178, %v220, %v214
        %vm225 = vcmask 1046528
        %v226 = vrot.slane %v150, 1
        %v227 = vrot.slane %v151, 1
        %v228 = vsel %vm225, %v226, %v227
        %v232 = vsel %vm225, %v227, %v226
        %v233 = vsub.f32 %v228, %v150
        %v234 = vsub.f32 %v232, %v151
        %v235 = vrot.slane %v153, 1
        %v236 = vrot.slane %v154, 1
        %v237 = vsel %vm225, %v235, %v236
        %v241 = vsel %vm225, %v236, %v235
        %v242 = vsub.f32 %v237, %v153
        %v243 = vsub.f32 %v241, %v154
        %v244 = vrot.slane %v156, 1
        %v245 = vrot.slane %v157, 1
        %v246 = vsel %vm225, %v244, %v245
        %v250 = vsel %vm225, %v245, %v244
        %v251 = vsub.f32 %v246, %v156
        %v252 = vsub.f32 %v250, %v157
        %p253 = scmp.eq.s32.totalorder %s20, 0
        // Predicated region
        $region29: #{tpu_custom_call.1} parent=23 // pred_check
          %p254 = pneg %p253
        $region30: #{tpu_custom_call.1} parent=23 // pred_check_branch
          %256 = sbr.rel (%p254) target = $region32
        $region31: #{tpu_custom_call.1} parent=23 // pred_region
          %vm257 = vcmask 0
          %258 = vst.msk [vmem:[%s149] sm:$0x1] %vm257, 0.0
        $region32: #{tpu_custom_call.1} parent=23 // pred_fallthru
          _
        %v259 = vsub.f32 %v233, %v242
        %v260 = vsub.f32 %v234, %v243
        %v261 = vsub.f32 %v233, %v251
        %v262 = vsub.f32 %v234, %v252
        %v263 = vsub.f32 %v242, %v251
        %v264 = vsub.f32 %v243, %v252
        %v265 = vsub.f32 %v179, %v201
        %v266 = vsub.f32 %v180, %v202
        %v267 = vsub.f32 %v179, %v223
        %v268 = vsub.f32 %v180, %v224
        %v269 = vsub.f32 %v201, %v223
        %v270 = vsub.f32 %v202, %v224
        %v271 = vmul.f32 %v233, %v233
        %v272 = vmul.f32 %v234, %v234
        %v273 = vmul.f32 %v179, %v179
        %v274 = vmul.f32 %v180, %v180
        %v275 = vadd.f32 %v271, %v273
        %v276 = vadd.f32 %v272, %v274
        %v277 = vrsqrt.pop %v275
        %v278 = vmul.f32 %v275, %v277
        %vm279 = vcmp.eq.f32.partialorder %v275, inf
        %v280 = vsel %vm279, %v275, %v278
        %vm281 = vcmp.eq.f32.partialorder %v275, 0.0
        %v282 = vand.u32 %v275, 2147483648
        %v283 = vsel %vm281, %v282, %v280
        %v284 = vrsqrt.pop %v276
        %v285 = vmul.f32 %v276, %v284
        %vm286 = vcmp.eq.f32.partialorder %v276, inf
        %v287 = vsel %vm286, %v276, %v285
        %vm288 = vcmp.eq.f32.partialorder %v276, 0.0
        %v289 = vand.u32 %v276, 2147483648
        %v290 = vsel %vm288, %v289, %v287
        %v291 = vmul.f32 %v242, %v242
        %v292 = vmul.f32 %v243, %v243
        %v293 = vmul.f32 %v201, %v201
        %v294 = vmul.f32 %v202, %v202
        %v295 = vadd.f32 %v291, %v293
        %v296 = vadd.f32 %v292, %v294
        %v297 = vrsqrt.pop %v295
        %v298 = vmul.f32 %v295, %v297
        %vm299 = vcmp.eq.f32.partialorder %v295, inf
        %v300 = vsel %vm299, %v295, %v298
        %vm301 = vcmp.eq.f32.partialorder %v295, 0.0
        %v302 = vand.u32 %v295, 2147483648
        %v303 = vsel %vm301, %v302, %v300
        %v304 = vrsqrt.pop %v296
        %v305 = vmul.f32 %v296, %v304
        %vm306 = vcmp.eq.f32.partialorder %v296, inf
        %v307 = vsel %vm306, %v296, %v305
        %vm308 = vcmp.eq.f32.partialorder %v296, 0.0
        %v309 = vand.u32 %v296, 2147483648
        %v310 = vsel %vm308, %v309, %v307
        %v311 = vadd.f32 %v283, %v303
        %v312 = vadd.f32 %v290, %v310
        %v313 = vmul.f32 %v251, %v251
        %v314 = vmul.f32 %v252, %v252
        %v315 = vmul.f32 %v223, %v223
        %v316 = vmul.f32 %v224, %v224
        %v317 = vadd.f32 %v313, %v315
        %v318 = vadd.f32 %v314, %v316
        %v319 = vrsqrt.pop %v317
        %v320 = vmul.f32 %v317, %v319
        %vm321 = vcmp.eq.f32.partialorder %v317, inf
        %v322 = vsel %vm321, %v317, %v320
        %vm323 = vcmp.eq.f32.partialorder %v317, 0.0
        %v324 = vand.u32 %v317, 2147483648
        %v325 = vsel %vm323, %v324, %v322
        %v326 = vrsqrt.pop %v318
        %v327 = vmul.f32 %v318, %v326
        %vm328 = vcmp.eq.f32.partialorder %v318, inf
        %v329 = vsel %vm328, %v318, %v327
        %vm330 = vcmp.eq.f32.partialorder %v318, 0.0
        %v331 = vand.u32 %v318, 2147483648
        %v332 = vsel %vm330, %v331, %v329
        %v333 = vadd.f32 %v311, %v325
        %v334 = vadd.f32 %v312, %v332
        %v335 = vmul.f32 %v259, %v259
        %v336 = vmul.f32 %v260, %v260
        %v337 = vmul.f32 %v265, %v265
        %v338 = vmul.f32 %v266, %v266
        %v339 = vadd.f32 %v335, %v337
        %v340 = vadd.f32 %v336, %v338
        %v341 = vrsqrt.pop %v339
        %v342 = vmul.f32 %v339, %v341
        %vm343 = vcmp.eq.f32.partialorder %v339, inf
        %v344 = vsel %vm343, %v339, %v342
        %vm345 = vcmp.eq.f32.partialorder %v339, 0.0
        %v346 = vand.u32 %v339, 2147483648
        %v347 = vsel %vm345, %v346, %v344
        %v348 = vrsqrt.pop %v340
        %v349 = vmul.f32 %v340, %v348
        %vm350 = vcmp.eq.f32.partialorder %v340, inf
        %v351 = vsel %vm350, %v340, %v349
        %vm352 = vcmp.eq.f32.partialorder %v340, 0.0
        %v353 = vand.u32 %v340, 2147483648
        %v354 = vsel %vm352, %v353, %v351
        %v355 = vadd.f32 %v333, %v347
        %v356 = vadd.f32 %v334, %v354
        %v357 = vmul.f32 %v261, %v261
        %v358 = vmul.f32 %v262, %v262
        %v359 = vmul.f32 %v267, %v267
        %v360 = vmul.f32 %v268, %v268
        %v361 = vadd.f32 %v357, %v359
        %v362 = vadd.f32 %v358, %v360
        %v363 = vrsqrt.pop %v361
        %v364 = vmul.f32 %v361, %v363
        %vm365 = vcmp.eq.f32.partialorder %v361, inf
        %v366 = vsel %vm365, %v361, %v364
        %vm367 = vcmp.eq.f32.partialorder %v361, 0.0
        %v368 = vand.u32 %v361, 2147483648
        %v369 = vsel %vm367, %v368, %v366
        %v370 = vrsqrt.pop %v362
        %v371 = vmul.f32 %v362, %v370
        %vm372 = vcmp.eq.f32.partialorder %v362, inf
        %v373 = vsel %vm372, %v362, %v371
        %vm374 = vcmp.eq.f32.partialorder %v362, 0.0
        %v375 = vand.u32 %v362, 2147483648
        %v376 = vsel %vm374, %v375, %v373
        %v377 = vadd.f32 %v355, %v369
        %v378 = vadd.f32 %v356, %v376
        %v379 = vmul.f32 %v263, %v263
        %v380 = vmul.f32 %v264, %v264
        %v381 = vmul.f32 %v269, %v269
        %v382 = vmul.f32 %v270, %v270
        %v383 = vadd.f32 %v379, %v381
        %v384 = vadd.f32 %v380, %v382
        %v385 = vrsqrt.pop %v383
        %v386 = vmul.f32 %v383, %v385
        %vm387 = vcmp.eq.f32.partialorder %v383, inf
        %v388 = vsel %vm387, %v383, %v386
        %vm389 = vcmp.eq.f32.partialorder %v383, 0.0
        %v390 = vand.u32 %v383, 2147483648
        %v391 = vsel %vm389, %v390, %v388
        %v392 = vrsqrt.pop %v384
        %v393 = vmul.f32 %v384, %v392
        %vm394 = vcmp.eq.f32.partialorder %v384, inf
        %v395 = vsel %vm394, %v384, %v393
        %vm396 = vcmp.eq.f32.partialorder %v384, 0.0
        %v397 = vand.u32 %v384, 2147483648
        %v398 = vsel %vm396, %v397, %v395
        %v399 = vadd.f32 %v377, %v391
        %v400 = vadd.f32 %v378, %v398
        %v401 = vlaneseq
        %v402 = vshrl.u32 %v401, 7
        %v403 = vadd.s32 %v402, 8
        %vm404 = vcmp.lt.s32.totalorder %v402, 15
        %vm405 = vcmp.lt.s32.totalorder %v403, 15
        %v406 = vsel %vm404, %v399, 0.0
        %v407 = vsel %vm405, %v400, 0.0
        %v408 = vld [vmem:[%s149] sm:$0x1]
        %vm409 = vcmask 130048
        %v410 = vsel %vm409, %v406, 0.0
        %v411 = vsel %vm409, %v407, 0.0
        %v412 = vadd.f32 %v410, %v411
        %413 = vadd.xlane.f32.xlu0 %v412
        %v414 = vpop.xlane.xlu0 %413
        %v415 = vrot.slane %v414, 4
        %v416 = vadd.f32 %v414, %v415
        %v417 = vrot.slane %v416, 2
        %v418 = vadd.f32 %v416, %v417
        %v419 = vrot.slane %v418, 1
        %v420 = vadd.f32 %v418, %v419
        %s421 = vtos %v420
        %v422 = vstv %s421
        %v423 = vadd.f32 %v408, %v422
        %vm424 = vcmask 0
        %425 = vst.msk [vmem:[%s149] sm:$0x1] %vm424, %v423
        %p426 = scmp.gt.s32.totalorder %s20, 0
        // Predicated region
        $region33: #{tpu_custom_call.1} parent=23 // pred_check
          %p427 = pneg %p426
        $region34: #{tpu_custom_call.1} parent=23 // pred_check_branch
          %429 = sbr.rel (%p427) target = $region36
        $region35: #{tpu_custom_call.1} parent=23 // pred_region
          %v430 = vld [vmem:[#allocation2] sm:$0x1]
          %v431 = vld [vmem:[#allocation2 + $0x1] sm:$0x1]
          %v432 = vld [vmem:[#allocation2 + $0x2] sm:$0x1]
          %v433 = vld [vmem:[#allocation2 + $0x3] sm:$0x1]
          %v434 = vld [vmem:[#allocation2 + $0x4] sm:$0x1]
          %v435 = vld [vmem:[#allocation2 + $0x5] sm:$0x1]
          %v436 = vsub.f32 %v150, %v430
          %v437 = vsub.f32 %v153, %v431
          %v438 = vsub.f32 %v156, %v432
          %v439 = vsub.f32 %v436, %v437
          %v440 = vsub.f32 %v436, %v438
          %v441 = vsub.f32 %v437, %v438
          %v442 = vsub.f32 %v433, %v434
          %v443 = vsub.f32 %v433, %v435
          %v444 = vsub.f32 %v434, %v435
          %v445 = vmul.f32 %v436, %v436
          %v446 = vmul.f32 %v433, %v433
          %v447 = vadd.f32 %v445, %v446
          %v448 = vrsqrt.pop %v447
          %v449 = vmul.f32 %v447, %v448
          %vm450 = vcmp.eq.f32.partialorder %v447, inf
          %v451 = vsel %vm450, %v447, %v449
          %vm452 = vcmp.eq.f32.partialorder %v447, 0.0
          %v453 = vand.u32 %v447, 2147483648
          %v454 = vsel %vm452, %v453, %v451
          %v455 = vmul.f32 %v437, %v437
          %v456 = vmul.f32 %v434, %v434
          %v457 = vadd.f32 %v455, %v456
          %v458 = vrsqrt.pop %v457
          %v459 = vmul.f32 %v457, %v458
          %vm460 = vcmp.eq.f32.partialorder %v457, inf
          %v461 = vsel %vm460, %v457, %v459
          %vm462 = vcmp.eq.f32.partialorder %v457, 0.0
          %v463 = vand.u32 %v457, 2147483648
          %v464 = vsel %vm462, %v463, %v461
          %v465 = vadd.f32 %v454, %v464
          %v466 = vmul.f32 %v438, %v438
          %v467 = vmul.f32 %v435, %v435
          %v468 = vadd.f32 %v466, %v467
          %v469 = vrsqrt.pop %v468
          %v470 = vmul.f32 %v468, %v469
          %vm471 = vcmp.eq.f32.partialorder %v468, inf
          %v472 = vsel %vm471, %v468, %v470
          %vm473 = vcmp.eq.f32.partialorder %v468, 0.0
          %v474 = vand.u32 %v468, 2147483648
          %v475 = vsel %vm473, %v474, %v472
          %v476 = vadd.f32 %v465, %v475
          %v477 = vmul.f32 %v439, %v439
          %v478 = vmul.f32 %v442, %v442
          %v479 = vadd.f32 %v477, %v478
          %v480 = vrsqrt.pop %v479
          %v481 = vmul.f32 %v479, %v480
          %vm482 = vcmp.eq.f32.partialorder %v479, inf
          %v483 = vsel %vm482, %v479, %v481
          %vm484 = vcmp.eq.f32.partialorder %v479, 0.0
          %v485 = vand.u32 %v479, 2147483648
          %v486 = vsel %vm484, %v485, %v483
          %v487 = vadd.f32 %v476, %v486
          %v488 = vmul.f32 %v440, %v440
          %v489 = vmul.f32 %v443, %v443
          %v490 = vadd.f32 %v488, %v489
          %v491 = vrsqrt.pop %v490
          %v492 = vmul.f32 %v490, %v491
          %vm493 = vcmp.eq.f32.partialorder %v490, inf
          %v494 = vsel %vm493, %v490, %v492
          %vm495 = vcmp.eq.f32.partialorder %v490, 0.0
          %v496 = vand.u32 %v490, 2147483648
          %v497 = vsel %vm495, %v496, %v494
          %v498 = vadd.f32 %v487, %v497
          %v499 = vmul.f32 %v441, %v441
          %v500 = vmul.f32 %v444, %v444
          %v501 = vadd.f32 %v499, %v500
          %v502 = vrsqrt.pop %v501
          %v503 = vmul.f32 %v501, %v502
          %vm504 = vcmp.eq.f32.partialorder %v501, inf
          %v505 = vsel %vm504, %v501, %v503
          %vm506 = vcmp.eq.f32.partialorder %v501, 0.0
          %v507 = vand.u32 %v501, 2147483648
          %v508 = vsel %vm506, %v507, %v505
          %v509 = vadd.f32 %v498, %v508
          %v510 = vld [vmem:[%s149] sm:$0x1]
          %vm511 = vcmask 122880
          %v512 = vsel %vm511, %v509, 0.0
          %513 = vadd.xlane.f32.xlu0 %v512
          %v514 = vpop.xlane.xlu0 %513
          %v515 = vrot.slane %v514, 4
          %v516 = vadd.f32 %v514, %v515
          %v517 = vrot.slane %v516, 2
          %v518 = vadd.f32 %v516, %v517
          %v519 = vrot.slane %v518, 1
          %v520 = vadd.f32 %v518, %v519
          %s521 = vtos %v520
          %v522 = vstv %s521
          %v523 = vadd.f32 %v510, %v522
          %524 = vst.msk [vmem:[%s149] sm:$0x1] %vm424, %v523
        $region36: #{tpu_custom_call.1} parent=23 // pred_fallthru
          _
        // Predicated region
        $region37: #{tpu_custom_call.1} parent=23 // pred_check
          %p525 = pneg %p253
        $region38: #{tpu_custom_call.1} parent=23 // pred_check_branch
          %527 = sbr.rel (%p525) target = $region40
        $region39: #{tpu_custom_call.1} parent=23 // pred_region
          %v528 = vsub.f32 %v169, %v192
          %v529 = vsub.f32 %v169, %v214
          %v530 = vsub.f32 %v192, %v214
          %v531 = vmul.f32 %v169, %v169
          %v532 = vadd.f32 %v531, %v274
          %v533 = vrsqrt.pop %v532
          %v534 = vmul.f32 %v532, %v533
          %vm535 = vcmp.eq.f32.partialorder %v532, inf
          %v536 = vsel %vm535, %v532, %v534
          %vm537 = vcmp.eq.f32.partialorder %v532, 0.0
          %v538 = vand.u32 %v532, 2147483648
          %v539 = vsel %vm537, %v538, %v536
          %v540 = vmul.f32 %v192, %v192
          %v541 = vadd.f32 %v540, %v294
          %v542 = vrsqrt.pop %v541
          %v543 = vmul.f32 %v541, %v542
          %vm544 = vcmp.eq.f32.partialorder %v541, inf
          %v545 = vsel %vm544, %v541, %v543
          %vm546 = vcmp.eq.f32.partialorder %v541, 0.0
          %v547 = vand.u32 %v541, 2147483648
          %v548 = vsel %vm546, %v547, %v545
          %v549 = vadd.f32 %v539, %v548
          %v550 = vmul.f32 %v214, %v214
          %v551 = vadd.f32 %v550, %v316
          %v552 = vrsqrt.pop %v551
          %v553 = vmul.f32 %v551, %v552
          %vm554 = vcmp.eq.f32.partialorder %v551, inf
          %v555 = vsel %vm554, %v551, %v553
          %vm556 = vcmp.eq.f32.partialorder %v551, 0.0
          %v557 = vand.u32 %v551, 2147483648
          %v558 = vsel %vm556, %v557, %v555
          %v559 = vadd.f32 %v549, %v558
          %v560 = vmul.f32 %v528, %v528
          %v561 = vadd.f32 %v560, %v338
          %v562 = vrsqrt.pop %v561
          %v563 = vmul.f32 %v561, %v562
          %vm564 = vcmp.eq.f32.partialorder %v561, inf
          %v565 = vsel %vm564, %v561, %v563
          %vm566 = vcmp.eq.f32.partialorder %v561, 0.0
          %v567 = vand.u32 %v561, 2147483648
          %v568 = vsel %vm566, %v567, %v565
          %v569 = vadd.f32 %v559, %v568
          %v570 = vmul.f32 %v529, %v529
          %v571 = vadd.f32 %v570, %v360
          %v572 = vrsqrt.pop %v571
          %v573 = vmul.f32 %v571, %v572
          %vm574 = vcmp.eq.f32.partialorder %v571, inf
          %v575 = vsel %vm574, %v571, %v573
          %vm576 = vcmp.eq.f32.partialorder %v571, 0.0
          %v577 = vand.u32 %v571, 2147483648
          %v578 = vsel %vm576, %v577, %v575
          %v579 = vadd.f32 %v569, %v578
          %v580 = vmul.f32 %v530, %v530
          %v581 = vadd.f32 %v580, %v382
          %v582 = vrsqrt.pop %v581
          %v583 = vmul.f32 %v581, %v582
          %vm584 = vcmp.eq.f32.partialorder %v581, inf
          %v585 = vsel %vm584, %v581, %v583
          %vm586 = vcmp.eq.f32.partialorder %v581, 0.0
          %v587 = vand.u32 %v581, 2147483648
          %v588 = vsel %vm586, %v587, %v585
          %v589 = vadd.f32 %v579, %v588
          %v590 = vld [vmem:[%s149] sm:$0x1]
          %v592 = vrot.slane %v589, 7
          %vm594 = vcmask 122880
          %v595 = vsel %vm594, %v592, 0.0
          %596 = vadd.xlane.f32.xlu0 %v595
          %v597 = vpop.xlane.xlu0 %596
          %v598 = vrot.slane %v597, 4
          %v599 = vadd.f32 %v597, %v598
          %v600 = vrot.slane %v599, 2
          %v601 = vadd.f32 %v599, %v600
          %v602 = vrot.slane %v601, 1
          %v603 = vadd.f32 %v601, %v602
          %s604 = vtos %v603
          %v605 = vstv %s604
          %v606 = vadd.f32 %v590, %v605
          %607 = vst.msk [vmem:[%s149] sm:$0x1] %vm424, %v606
        $region40: #{tpu_custom_call.1} parent=23 // pred_fallthru
          _
        %vm608 = vcmask 130055
        %609 = vst.msk [vmem:[#allocation2 - $0x7] sm:$0x80] %vm608, %v151
        %610 = vst.msk [vmem:[#allocation2 - $0x6] sm:$0x80] %vm608, %v154
        %611 = vst.msk [vmem:[#allocation2 - $0x5] sm:$0x80] %vm608, %v157
        %612 = vst.msk [vmem:[#allocation2 - $0x4] sm:$0x80] %vm608, %v180
        %613 = vst.msk [vmem:[#allocation2 - $0x3] sm:$0x80] %vm608, %v202
        %614 = vst.msk [vmem:[#allocation2 - $0x2] sm:$0x80] %vm608, %v224
        %p615 = scmp.lt.s32.totalorder %s19, 1
        %s616 = scalar_select %p615, %s19, 1
        %s617 = scalar_lea.vmem %s1, %s616
        // Predicated region
        $region41: #{tpu_custom_call.1} parent=23 // pred_check
          %p618 = pneg %p73
        $region42: #{tpu_custom_call.1} parent=23 // pred_check_branch
          %620 = sbr.rel (%p618) target = $region44
        $region43: #{tpu_custom_call.1} parent=23 // pred_region
          _
        $region44: #{tpu_custom_call.1} parent=23 // pred_fallthru
          _
      $region24: #{tpu_custom_call.1} parent=5 // pred_fallthru
        _
      %p621 = scmp.le.s32.totalorder 2, %s10
      // Predicated region
      $region45: #{tpu_custom_call.1} parent=5 // pred_check
        %p622 = pneg %p621
      $region46: #{tpu_custom_call.1} parent=5 // pred_check_branch
        %624 = sbr.rel (%p622) target = $region48
      $region47: #{tpu_custom_call.1} parent=5 // pred_region
        %s625 = ssub.s32 %s10, 2
        // Predicated region
        $region49: #{tpu_custom_call.1} parent=47 // pred_check
          %p626 = pneg %p79
        $region50: #{tpu_custom_call.1} parent=47 // pred_check_branch
          %628 = sbr.rel (%p626) target = $region52
        $region51: #{tpu_custom_call.1} parent=47 // pred_region
          %p629 = scmp.lt.s32.totalorder %s21, 1
          %s630 = scalar_select %p629, %s21, 1
          %s631 = scalar_lea.vmem %s1, %s630
        $region52: #{tpu_custom_call.1} parent=47 // pred_fallthru
          _
      $region48: #{tpu_custom_call.1} parent=5 // pred_fallthru
        _
    $region6: #{tpu_custom_call.1} parent=1 // loop_footer
      %s14 = sadd.s32 1, %s10
    $region7: #{tpu_custom_call.1} parent=1 // loop_footer_branch
      %9 = sbr.rel target = $region3
    $region8: #{tpu_custom_call.1} parent=1 // loop_exit
      _
    %632 = vsyncpa [#allocation4], 1
    %s633 = scalar_lea.sflag [#allocation4], 1
    %634 = vsyncpa %s633, 1

</llo_original>
